<compile_context>
chip_gen: v7x
topology: tpu7x:2x2x1
jax: 0.10.0
libtpu: 0.0.40
codegen_flags: <defaults>
</compile_context>

<pallas_src>
import functools

import jax
import jax.numpy as jnp
from jax.experimental import pallas as pl
from jax.experimental.pallas import tpu as pltpu


def _round_up(x, m):
    return (x + m - 1) // m * m


def zero_shot_head_kernel(h_ref, w_ref, mask_ref, cnt_ref, out_ref,
                          m_sc, l_sc, acc_sc, *, v_total, tv, has_pad):
    """One (row-tile, vocab-tile) grid step of the zero-shot head.

    h_ref    : (TM, H)   bf16  hidden states at sequence position 0 (row tile)
    w_ref    : (H, TV)   bf16  lm-head weight, vocab tile
    mask_ref : (TV, Lp)  bf16  label-token count matrix, vocab tile (lane-padded labels)
    cnt_ref  : (1, Lp)   f32   per-label token counts (precomputed in wrapper)
    out_ref  : (TM, Lp)  f32   Σ_label_tokens log_softmax(logits)  (resident across k)
    scratch  : m_sc (TM,1) running max, l_sc (TM,1) running exp-sum,
               acc_sc (TM,Lp) Σ logits @ mask
    """
    k = pl.program_id(1)

    @pl.when(k == 0)
    def _():
        m_sc[...] = jnp.full_like(m_sc, -jnp.inf)
        l_sc[...] = jnp.zeros_like(l_sc)
        acc_sc[...] = jnp.zeros_like(acc_sc)

    # lm-head matmul for this vocab tile (bf16 in, f32 accumulate on the MXU)
    logits = jnp.dot(h_ref[...], w_ref[...],
                     preferred_element_type=jnp.float32)            # (TM, TV)

    # padded vocab lanes (zero-padded W columns) must not enter the logsumexp
    if has_pad:
        col = k * tv + jax.lax.broadcasted_iota(jnp.int32, logits.shape, 1)
        logits_lse = jnp.where(col < v_total, logits, -jnp.inf)
    else:
        logits_lse = logits

    # online logsumexp over the tiled vocab axis
    m_new = jnp.maximum(m_sc[...], jnp.max(logits_lse, axis=-1, keepdims=True))
    l_sc[...] = (l_sc[...] * jnp.exp(m_sc[...] - m_new)
                 + jnp.sum(jnp.exp(logits_lse - m_new), axis=-1, keepdims=True))
    m_sc[...] = m_new

    # Σ_v logits[r, v] * mask[v, l]   (padded vocab rows of mask are zero -> no effect;
    # HIGHEST precision keeps full f32 logits in the label sum; tiny vs. main matmul)
    acc_sc[...] += jnp.dot(logits, mask_ref[...].astype(jnp.float32),
                           preferred_element_type=jnp.float32,
                           precision=jax.lax.Precision.HIGHEST)

    @pl.when(k == pl.num_programs(1) - 1)
    def _():
        # Σ_v mask[v,l] * (logits[r,v] - lse[r]) = acc[r,l] - lse[r] * cnt[l]
        lse = m_sc[...] + jnp.log(l_sc[...])                         # (TM, 1)
        out_ref[...] = acc_sc[...] - lse * cnt_ref[...]


def llama_zero_shot_classifier(input_ids, emb_table, w_head, label_mask_t,
                               *, tv=None, weight_buffers=3, lane_pad=128):
    """input_ids: (B, S) int32; returns (B, num_labels) float32."""
    B, S = input_ids.shape
    V, H = emb_table.shape
    L = label_mask_t.shape[1]

    # TODO(synk): the full pretrained Llama backbone (RMSNorm/attention/MLP stack,
    # tokenizer, checkpoint load) has no in-script equivalent; it is replaced by a
    # deterministic synthetic embedding + lm-head producing the logits.
    # The classifier only consumes sequence position 0, so only those hidden
    # states are computed and fed to the kernel (no S x wasted lm-head work).
    h0 = emb_table[input_ids[:, 0]]                                  # (B, H)

    # --- per-generation VMEM budget -------------------------------------------------
    try:
        vmem_cap = int(pltpu.get_tpu_info().vmem_capacity_bytes)
    except Exception:  # pragma: no cover - conservative fallback
        vmem_cap = 64 * 1024 * 1024
    # keep headroom for compiler scratch; cap ~48 MiB on 64 MiB v7x, ~96 MiB on v5e/v6e
    vmem_limit = max(32 * 1024 * 1024, min(vmem_cap * 3 // 4, 96 * 1024 * 1024))

    # vocab tile: biggest power-of-two (<=4096) whose buffered weight tiles fit in
    # ~half of VMEM  (H=4096 -> tv=1024 on 64 MiB, tv=2048 on 128 MiB)
    if tv is None:
        budget = vmem_cap // 2
        tv = 128
        while tv < 4096 and weight_buffers * H * (tv * 2) * 2 <= budget:
            tv *= 2
    tv = max(128, min(_round_up(tv, 128), _round_up(V, 128)))

    # pad vocab so the tile divides it; padded lanes are -inf-masked in the kernel
    Vp = _round_up(V, tv)
    nk = Vp // tv
    has_pad = Vp > V

    # rows: a single tile covering the whole padded batch so the weight streams
    # from HBM exactly once (only split rows for very large batches)
    tm = min(_round_up(max(B, 16), 16), 512)
    rows_pad = _round_up(B, tm)
    h_pad = jnp.zeros((rows_pad, H), jnp.bfloat16).at[:B].set(h0.astype(jnp.bfloat16))

    # lm-head weight, zero-padded on the vocab axis, bf16 stream
    w_bf16 = jnp.zeros((H, Vp), jnp.bfloat16).at[:, :V].set(w_head.astype(jnp.bfloat16))

    # lane-dense labels: pad num_labels up to 128 lanes; counts are small integers,
    # exact in bf16 (halves mask HBM traffic)
    Lp = _round_up(max(L, lane_pad), lane_pad)
    mask_pad = jnp.zeros((Vp, Lp), jnp.bfloat16).at[:V, :L].set(
        label_mask_t.astype(jnp.bfloat16))
    # per-label token counts, precomputed once (removes per-step XLU reduce)
    cnt = jnp.zeros((1, Lp), jnp.float32).at[0, :L].set(
        jnp.sum(label_mask_t.astype(jnp.float32), axis=0))

    # weight spec: 3-deep buffering on the dominant streaming input when useful
    if nk >= weight_buffers:
        w_spec = pl.BlockSpec((H, tv), lambda i, k: (0, k),
                              pipeline_mode=pl.Buffered(weight_buffers))
    else:
        w_spec = pl.BlockSpec((H, tv), lambda i, k: (0, k))

    n_row_tiles = rows_pad // tm
    grid = (n_row_tiles, nk)
    cost = pl.CostEstimate(
        flops=2 * rows_pad * H * Vp + 2 * rows_pad * Vp * Lp,
        transcendentals=rows_pad * Vp,
        bytes_accessed=(H * Vp * 2 + Vp * Lp * 2) * n_row_tiles
                       + rows_pad * H * 2 + rows_pad * Lp * 4 + Lp * 4,
    )

    kernel = functools.partial(zero_shot_head_kernel,
                               v_total=V, tv=tv, has_pad=has_pad)

    out = pl.pallas_call(
        kernel,
        out_shape=jax.ShapeDtypeStruct((rows_pad, Lp), jnp.float32),
        grid_spec=pltpu.PrefetchScalarGridSpec(
            num_scalar_prefetch=0,
            grid=grid,
            in_specs=[
                pl.BlockSpec((tm, H), lambda i, k: (i, 0)),     # hidden rows
                w_spec,                                         # weight vocab tile
                pl.BlockSpec((tv, Lp), lambda i, k: (k, 0)),    # mask vocab tile
                pl.BlockSpec((1, Lp), lambda i, k: (0, 0)),     # per-label counts
            ],
            out_specs=pl.BlockSpec((tm, Lp), lambda i, k: (i, 0)),
            scratch_shapes=[
                pltpu.VMEM((tm, 1), jnp.float32),    # running max m
                pltpu.VMEM((tm, 1), jnp.float32),    # running exp-sum l
                pltpu.VMEM((tm, Lp), jnp.float32),   # Σ logits @ mask
            ],
        ),
        compiler_params=pltpu.CompilerParams(
            dimension_semantics=("parallel", "arbitrary"),
            vmem_limit_bytes=vmem_limit,
        ),
        cost_estimate=cost,
    )(h_pad, w_bf16, mask_pad, cnt)

    return out[:B, :L]


if __name__ == "__main__":
    key = jax.random.PRNGKey(0)
    B, S, H, V = 2, 8, 32, 128          # batch, seq, hidden, vocab
    num_labels, toks_per_label = 4, 2

    k1, k2, k3, k4 = jax.random.split(key, 4)
    emb_table = jax.random.normal(k1, (V, H), jnp.float32) * 0.02
    w_head = jax.random.normal(k2, (H, V), jnp.float32) * 0.02
    input_ids = jax.random.randint(k3, (B, S), 0, V, dtype=jnp.int32)
    # deterministic "tokenizer.encode(label)" results
    label_token_ids = jax.random.randint(
        k4, (num_labels, toks_per_label), 0, V, dtype=jnp.int32)

    # count matrix: label_mask_t[v, i] = #times vocab token v appears in label i's ids
    label_mask_t = jnp.zeros((V, num_labels), jnp.float32)
    for i in range(num_labels):
        for t in label_token_ids[i]:
            label_mask_t = label_mask_t.at[int(t), i].add(1.0)

    out = llama_zero_shot_classifier(input_ids, emb_table, w_head, label_mask_t)
    out = jax.block_until_ready(out)

    # pure-JAX reference of the PyTorch forward
    hidden = emb_table[input_ids]                        # (B, S, H)
    logits = jnp.einsum("bsh,hv->bsv", hidden, w_head)   # (B, S, V)
    logp = jax.nn.log_softmax(logits, axis=-1)
    ref = jnp.zeros((B, num_labels), jnp.float32)
    for i in range(num_labels):
        ids = [int(t) for t in label_token_ids[i]]
        total = jnp.sum(logp[:, :, ids], axis=-1)        # (B, S)
        ref = ref.at[:, i].set(total[:, 0])

    assert out.shape == (B, num_labels)
    # bf16 weight/activation stream -> loosened tolerance vs. f32 reference
    assert jnp.allclose(out, ref, atol=2e-2, rtol=2e-2), (out, ref)
    print("KERNEL_OK")
</pallas_src>

<mosaic_0001>
module attributes {stable_mosaic.version = 11 : i64} {
  func.func @zero_shot_head_kernel(%arg0: i32, %arg1: i32, %arg2: memref<16x32xbf16, #tpu.memory_space<vmem>>, %arg3: memref<32x128xbf16, #tpu.memory_space<vmem>>, %arg4: memref<128x128xbf16, #tpu.memory_space<vmem>>, %arg5: memref<1x128xf32, #tpu.memory_space<vmem>>, %arg6: memref<16x128xf32, #tpu.memory_space<vmem>>, %arg7: memref<16x1xf32, #tpu.memory_space<vmem>>, %arg8: memref<16x1xf32, #tpu.memory_space<vmem>>, %arg9: memref<16x128xf32, #tpu.memory_space<vmem>>) attributes {dimension_semantics = [#tpu.dimension_semantics<parallel>, #tpu.dimension_semantics<arbitrary>], iteration_bounds = array<i64: 1, 1>, scalar_prefetch = 0 : i64, scratch_operands = 3 : i64, tpu.core_type = #tpu.core_type<tc>, window_params = [{transform_indices = @transform_0, window_bounds = array<i64: 16, 32>}, {transform_indices = @transform_1, window_bounds = array<i64: 32, 128>}, {transform_indices = @transform_2, window_bounds = array<i64: 128, 128>}, {pipeline_mode = #tpu.pipeline_mode<synchronous>, transform_indices = @transform_3, window_bounds = array<i64: 1, 128>}, {transform_indices = @transform_4, window_bounds = array<i64: 16, 128>}]} {
    %c0_i32 = arith.constant 0 : i32
    %0 = arith.cmpi eq, %arg1, %c0_i32 : i32
    %1 = arith.extui %0 : i1 to i32
    %c0_i32_0 = arith.constant 0 : i32
    %2 = arith.cmpi ne, %1, %c0_i32_0 : i32
    scf.if %2 {
      %cst_25 = arith.constant 0xFF800000 : f32
      %32 = vector.broadcast %cst_25 : f32 to vector<16x1xf32>
      %c0_26 = arith.constant 0 : index
      %c0_27 = arith.constant 0 : index
      %33 = vector.load %arg7[%c0_26, %c0_27] : memref<16x1xf32, #tpu.memory_space<vmem>>, vector<16x1xf32>
      tpu.vector_store %arg7[%c0_26, %c0_27], %32 {strides = array<i32>} : memref<16x1xf32, #tpu.memory_space<vmem>>, vector<16x1xf32>,
      %cst_28 = arith.constant 0.000000e+00 : f32
      %34 = vector.broadcast %cst_28 : f32 to vector<16x1xf32>
      %c0_29 = arith.constant 0 : index
      %c0_30 = arith.constant 0 : index
      %35 = vector.load %arg8[%c0_29, %c0_30] : memref<16x1xf32, #tpu.memory_space<vmem>>, vector<16x1xf32>
      tpu.vector_store %arg8[%c0_29, %c0_30], %34 {strides = array<i32>} : memref<16x1xf32, #tpu.memory_space<vmem>>, vector<16x1xf32>,
      %cst_31 = arith.constant 0.000000e+00 : f32
      %36 = vector.broadcast %cst_31 : f32 to vector<16x128xf32>
      %c0_32 = arith.constant 0 : index
      %c0_33 = arith.constant 0 : index
      %37 = vector.load %arg9[%c0_32, %c0_33] : memref<16x128xf32, #tpu.memory_space<vmem>>, vector<16x128xf32>
      tpu.vector_store %arg9[%c0_32, %c0_33], %36 {strides = array<i32>} : memref<16x128xf32, #tpu.memory_space<vmem>>, vector<16x128xf32>,
    } else {
    }
    %c0 = arith.constant 0 : index
    %c0_1 = arith.constant 0 : index
    %3 = vector.load %arg2[%c0, %c0_1] : memref<16x32xbf16, #tpu.memory_space<vmem>>, vector<16x32xbf16>
    %c0_2 = arith.constant 0 : index
    %c0_3 = arith.constant 0 : index
    %4 = vector.load %arg3[%c0_2, %c0_3] : memref<32x128xbf16, #tpu.memory_space<vmem>>, vector<32x128xbf16>
    %cst = arith.constant dense<0.000000e+00> : vector<16x128xf32>
    %5 = tpu.matmul %3, %4, %cst {dimension_numbers = #tpu.dot_dimension_numbers<[1], [0], [0], [1], [0, 0, 1, 1], [], []>} : vector<16x32xbf16>, vector<32x128xbf16>, vector<16x128xf32> -> vector<16x128xf32>
    %c0_4 = arith.constant 0 : index
    %c0_5 = arith.constant 0 : index
    %6 = vector.load %arg7[%c0_4, %c0_5] : memref<16x1xf32, #tpu.memory_space<vmem>>, vector<16x1xf32>
    %cst_6 = arith.constant dense<0xFF800000> : vector<16xf32>
    %7 = vector.multi_reduction <maximumf>, %5, %cst_6 [1] : vector<16x128xf32> to vector<16xf32>
    %8 = vector.shape_cast %7 : vector<16xf32> to vector<16x1xf32>
    %9 = arith.maximumf %6, %8 : vector<16x1xf32>
    %c0_7 = arith.constant 0 : index
    %c0_8 = arith.constant 0 : index
    %10 = vector.load %arg8[%c0_7, %c0_8] : memref<16x1xf32, #tpu.memory_space<vmem>>, vector<16x1xf32>
    %c0_9 = arith.constant 0 : index
    %c0_10 = arith.constant 0 : index
    %11 = vector.load %arg7[%c0_9, %c0_10] : memref<16x1xf32, #tpu.memory_space<vmem>>, vector<16x1xf32>
    %12 = arith.subf %11, %9 : vector<16x1xf32>
    %13 = math.exp %12 : vector<16x1xf32>
    %14 = arith.mulf %10, %13 : vector<16x1xf32>
    %15 = vector.broadcast %9 : vector<16x1xf32> to vector<16x128xf32>
    %16 = arith.subf %5, %15 : vector<16x128xf32>
    %17 = math.exp %16 : vector<16x128xf32>
    %cst_11 = arith.constant dense<0.000000e+00> : vector<16xf32>
    %18 = vector.multi_reduction <add>, %17, %cst_11 [1] : vector<16x128xf32> to vector<16xf32>
    %19 = vector.shape_cast %18 : vector<16xf32> to vector<16x1xf32>
    %20 = arith.addf %14, %19 : vector<16x1xf32>
    %c0_12 = arith.constant 0 : index
    %c0_13 = arith.constant 0 : index
    %21 = vector.load %arg8[%c0_12, %c0_13] : memref<16x1xf32, #tpu.memory_space<vmem>>, vector<16x1xf32>
    tpu.vector_store %arg8[%c0_12, %c0_13], %20 {strides = array<i32>} : memref<16x1xf32, #tpu.memory_space<vmem>>, vector<16x1xf32>,
    %c0_14 = arith.constant 0 : index
    %c0_15 = arith.constant 0 : index
    %22 = vector.load %arg7[%c0_14, %c0_15] : memref<16x1xf32, #tpu.memory_space<vmem>>, vector<16x1xf32>
    tpu.vector_store %arg7[%c0_14, %c0_15], %9 {strides = array<i32>} : memref<16x1xf32, #tpu.memory_space<vmem>>, vector<16x1xf32>,
    %c0_16 = arith.constant 0 : index
    %c0_17 = arith.constant 0 : index
    %23 = vector.load %arg9[%c0_16, %c0_17] : memref<16x128xf32, #tpu.memory_space<vmem>>, vector<16x128xf32>
    %c0_18 = arith.constant 0 : index
    %c0_19 = arith.constant 0 : index
    %24 = vector.load %arg4[%c0_18, %c0_19] : memref<128x128xbf16, #tpu.memory_space<vmem>>, vector<128x128xbf16>
    %25 = arith.extf %24 : vector<128x128xbf16> to vector<128x128xf32>
    %cst_20 = arith.constant dense<0.000000e+00> : vector<16x128xf32>
    %26 = tpu.matmul %5, %25, %cst_20 {dimension_numbers = #tpu.dot_dimension_numbers<[1], [0], [0], [1], [0, 0, 1, 1], [], []>, precision = #tpu.contract_precision<fp32>} : vector<16x128xf32>, vector<128x128xf32>, vector<16x128xf32> -> vector<16x128xf32>
    %27 = arith.addf %23, %26 : vector<16x128xf32>
    %c0_21 = arith.constant 0 : index
    %c0_22 = arith.constant 0 : index
    %28 = vector.load %arg9[%c0_21, %c0_22] : memref<16x128xf32, #tpu.memory_space<vmem>>, vector<16x128xf32>
    tpu.vector_store %arg9[%c0_21, %c0_22], %27 {strides = array<i32>} : memref<16x128xf32, #tpu.memory_space<vmem>>, vector<16x128xf32>,
    %c0_i32_23 = arith.constant 0 : i32
    %29 = arith.cmpi eq, %arg1, %c0_i32_23 : i32
    %30 = arith.extui %29 : i1 to i32
    %c0_i32_24 = arith.constant 0 : i32
    %31 = arith.cmpi ne, %30, %c0_i32_24 : i32
    scf.if %31 {
      %c0_25 = arith.constant 0 : index
      %c0_26 = arith.constant 0 : index
      %32 = vector.load %arg7[%c0_25, %c0_26] : memref<16x1xf32, #tpu.memory_space<vmem>>, vector<16x1xf32>
      %c0_27 = arith.constant 0 : index
      %c0_28 = arith.constant 0 : index
      %33 = vector.load %arg8[%c0_27, %c0_28] : memref<16x1xf32, #tpu.memory_space<vmem>>, vector<16x1xf32>
      %34 = math.log %33 : vector<16x1xf32>
      %35 = arith.addf %32, %34 : vector<16x1xf32>
      %c0_29 = arith.constant 0 : index
      %c0_30 = arith.constant 0 : index
      %36 = vector.load %arg9[%c0_29, %c0_30] : memref<16x128xf32, #tpu.memory_space<vmem>>, vector<16x128xf32>
      %c0_31 = arith.constant 0 : index
      %c0_32 = arith.constant 0 : index
      %37 = vector.load %arg5[%c0_31, %c0_32] : memref<1x128xf32, #tpu.memory_space<vmem>>, vector<1x128xf32>
      %38 = vector.broadcast %35 : vector<16x1xf32> to vector<16x128xf32>
      %39 = vector.broadcast %37 : vector<1x128xf32> to vector<16x128xf32>
      %40 = arith.mulf %38, %39 : vector<16x128xf32>
      %41 = arith.subf %36, %40 : vector<16x128xf32>
      %c0_33 = arith.constant 0 : index
      %c0_34 = arith.constant 0 : index
      %42 = vector.load %arg6[%c0_33, %c0_34] : memref<16x128xf32, #tpu.memory_space<vmem>>, vector<16x128xf32>
      tpu.vector_store %arg6[%c0_33, %c0_34], %41 {strides = array<i32>} : memref<16x128xf32, #tpu.memory_space<vmem>>, vector<16x128xf32>,
    } else {
    }
    return
  }
  func.func @transform_0(%arg0: i32, %arg1: i32) -> (i32, i32) {
    %c0_i32 = arith.constant 0 : i32
    %c0_i32_0 = arith.constant 0 : i32
    return %arg0, %c0_i32 : i32, i32
  }
  func.func @transform_1(%arg0: i32, %arg1: i32) -> (i32, i32) {
    %c0_i32 = arith.constant 0 : i32
    %c0_i32_0 = arith.constant 0 : i32
    return %c0_i32, %arg1 : i32, i32
  }
  func.func @transform_2(%arg0: i32, %arg1: i32) -> (i32, i32) {
    %c0_i32 = arith.constant 0 : i32
    %c0_i32_0 = arith.constant 0 : i32
    return %arg1, %c0_i32 : i32, i32
  }
  func.func @transform_3(%arg0: i32, %arg1: i32) -> (i32, i32) {
    %c0_i32 = arith.constant 0 : i32
    %c0_i32_0 = arith.constant 0 : i32
    %c0_i32_1 = arith.constant 0 : i32
    return %c0_i32, %c0_i32_0 : i32, i32
  }
  func.func @transform_4(%arg0: i32, %arg1: i32) -> (i32, i32) {
    %c0_i32 = arith.constant 0 : i32
    %c0_i32_0 = arith.constant 0 : i32
    return %arg0, %c0_i32 : i32, i32
  }
}

</mosaic_0001>

<llo_original>
// kernel: tpu_custom_call.1
$region0: #{tpu_custom_call.1}
  #allocation0 [shape = 'u32[]', space=smem, size = 0x4, offset = 0x4, fixed_abs, tag = 'smem constant byte address 0x4 - core index']
  #allocation1 [shape = 'u32[144,128]{1,0:T(1,128)}', space=vmem, size = 0x12000, scoped, tag = 'internal scratch']
  #allocation2 [shape = 'f32[16,1]{1,0:T(8,128)}', space=vmem, size = 0x2000, scoped, tag = 'scratch operand']
  #allocation3 [shape = 'f32[16,1]{1,0:T(8,128)}', space=vmem, size = 0x2000, scoped, tag = 'scratch operand']
  #allocation4 [shape = 'f32[16,128]{1,0:T(8,128)}', space=vmem, size = 0x2000, scoped, tag = 'scratch operand']
  %s0 = inlined_call_operand.hbm [shape: bf16[16,32], index: 0, kind: input, shape index: {}]
  %s1 = inlined_call_operand.hbm [shape: bf16[32,128], index: 1, kind: input, shape index: {}]
  %s2 = inlined_call_operand.hbm [shape: bf16[128,128], index: 2, kind: input, shape index: {}]
  %s3 = inlined_call_operand.vmem [shape: f32[1,128], index: 3, kind: input, shape index: {}]
  %s4 = inlined_call_operand.hbm [shape: f32[16,128], index: 4, kind: output, shape index: {}]
  %s5 = sld [smem:[#allocation0]]
  $region46: #{tpu_custom_call.1} parent=0
    _
  %s7 = ssub.s32 1, %s5
  %s8 = scalar_select 0, %s7, %s5
  $region1: #{tpu_custom_call.1} parent=0
    #allocation5 [shape = 'u8[4096]{0}', space=vmem, size = 0x1000, scoped, tag = 'input window, operand 0, single buffered']
    #allocation6 [shape = 's32[1]{0}', space=sflag, size = 0x4, scoped, tag = 'scoped memory for tpu_custom_call.1']
    #allocation7 [shape = 's32[1]{0}', space=sflag, size = 0x4, scoped, tag = 'scoped memory for tpu_custom_call.1']
    #allocation8 [shape = 'u8[8192]{0}', space=vmem, size = 0x2000, scoped, tag = 'input window, operand 1, single buffered']
    #allocation9 [shape = 's32[1]{0}', space=sflag, size = 0x4, scoped, tag = 'scoped memory for tpu_custom_call.1']
    #allocation10 [shape = 'u8[32768]{0}', space=vmem, size = 0x8000, scoped, tag = 'input window, operand 2, single buffered']
    #allocation11 [shape = 'u8[8192]{0}', space=vmem, size = 0x2000, scoped, tag = 'output window, operand 0, single buffered']
    %9 = vsyncpa [#allocation6], 0
    %10 = vsyncpa [#allocation9], 0
    %11 = vsyncpa [#allocation7], 0
    // Predicated region
    $region2: #{tpu_custom_call.1} parent=1 // pred_check
      _
    $region3: #{tpu_custom_call.1} parent=1 // pred_check_branch
      %13 = sbr.rel (0) target = $region5
    $region4: #{tpu_custom_call.1} parent=1 // pred_region
      %s15 = ssub.s32 128, 128
      %16 = vsyncadd [#allocation6], %s15
      %s17 = sshll.u32 [#allocation5], 4
      %s18 = int_to_ptr.vmem [resolvable:$true] %s17
      %23 = dma.hbm_to_vmem [thread:$0]  %s0, 128, %s18, [#allocation6], 64, 64, 4
    $region5: #{tpu_custom_call.1} parent=1 // pred_fallthru
      _
    // Predicated region
    $region6: #{tpu_custom_call.1} parent=1 // pred_check
      _
    $region7: #{tpu_custom_call.1} parent=1 // pred_check_branch
      %25 = sbr.rel (0) target = $region9
    $region8: #{tpu_custom_call.1} parent=1 // pred_region
      %s27 = ssub.s32 256, 256
      %28 = vsyncadd [#allocation9], %s27
      %s29 = sshll.u32 [#allocation8], 4
      %s30 = int_to_ptr.vmem [resolvable:$true] %s29
      %35 = dma.hbm_to_vmem [thread:$0]  %s1, 256, %s30, [#allocation9], 64, 64, 4
    $region9: #{tpu_custom_call.1} parent=1 // pred_fallthru
      _
    // Predicated region
    $region10: #{tpu_custom_call.1} parent=1 // pred_check
      _
    $region11: #{tpu_custom_call.1} parent=1 // pred_check_branch
      %37 = sbr.rel (0) target = $region13
    $region12: #{tpu_custom_call.1} parent=1 // pred_region
      %s39 = ssub.s32 1024, 1024
      %40 = vsyncadd [#allocation9], %s39
      %s41 = sshll.u32 [#allocation10], 4
      %s42 = int_to_ptr.vmem [resolvable:$true] %s41
      %47 = dma.hbm_to_vmem [thread:$0]  %s2, 1024, %s42, [#allocation9], 64, 64, 4
    $region13: #{tpu_custom_call.1} parent=1 // pred_fallthru
      _
    // Predicated region
    $region14: #{tpu_custom_call.1} parent=1 // pred_check
      _
    $region15: #{tpu_custom_call.1} parent=1 // pred_check_branch
      %49 = sbr.rel (0) target = $region17
    $region16: #{tpu_custom_call.1} parent=1 // pred_region
      _
    $region17: #{tpu_custom_call.1} parent=1 // pred_fallthru
      _
    // Predicated region
    $region18: #{tpu_custom_call.1} parent=1 // pred_check
      _
    $region19: #{tpu_custom_call.1} parent=1 // pred_check_branch
      %51 = sbr.rel (0) target = $region21
    $region20: #{tpu_custom_call.1} parent=1 // pred_region
      %52 = dma.done [#allocation6], 128
    $region21: #{tpu_custom_call.1} parent=1 // pred_fallthru
      _
    // Predicated region
    $region22: #{tpu_custom_call.1} parent=1 // pred_check
      _
    $region23: #{tpu_custom_call.1} parent=1 // pred_check_branch
      %54 = sbr.rel (0) target = $region25
    $region24: #{tpu_custom_call.1} parent=1 // pred_region
      %55 = dma.done [#allocation9], 256
    $region25: #{tpu_custom_call.1} parent=1 // pred_fallthru
      _
    // Predicated region
    $region26: #{tpu_custom_call.1} parent=1 // pred_check
      _
    $region27: #{tpu_custom_call.1} parent=1 // pred_check_branch
      %57 = sbr.rel (0) target = $region29
    $region28: #{tpu_custom_call.1} parent=1 // pred_region
      %58 = dma.done [#allocation9], 1024
    $region29: #{tpu_custom_call.1} parent=1 // pred_fallthru
      _
    %p60 = scmp.eq.s32.totalorder 0, 0
    // Predicated region
    $region30: #{tpu_custom_call.1} parent=1 // pred_check
      %p61 = pneg %p60
    $region31: #{tpu_custom_call.1} parent=1 // pred_check_branch
      %63 = sbr.rel (%p61) target = $region33
    $region32: #{tpu_custom_call.1} parent=1 // pred_region
      %vm64 = vcmask 7168
      %65 = vst.msk [vmem:[#allocation2] sm:$0xff] %vm64, -inf
      %66 = vst.msk [vmem:[#allocation2 + $0x8] sm:$0xff] %vm64, -inf
      %67 = vst.msk [vmem:[#allocation3] sm:$0xff] %vm64, 0.0
      %68 = vst.msk [vmem:[#allocation3 + $0x8] sm:$0xff] %vm64, 0.0
      %69 = vst [vmem:[#allocation4] sm:$0xff] 0.0
      %70 = vst [vmem:[#allocation4 + $0x8] sm:$0xff] 0.0
    $region33: #{tpu_custom_call.1} parent=1 // pred_fallthru
      _
    %v71 = vld [vmem:[#allocation5] sm:$0xf]
    %v72 = vld [vmem:[#allocation5 + $0x4] sm:$0xf]
    %v73 = vld [vmem:[#allocation8] sm:$0xf]
    %v74 = vld [vmem:[#allocation8 + $0x4] sm:$0xf]
    %v75 = vld [vmem:[#allocation8 + $0x8] sm:$0xf]
    %v76 = vld [vmem:[#allocation8 + $0xc] sm:$0xf]
    %v79 = vunpack.c.l.b16 %v71
    %v80 = vunpack.c.l.b16 %v72
    %v81 = vpack.c.b16 %v80, %v79
    %v86 = vunpack.c.l.b16 %v73
    %v87 = vunpack.c.l.b16 %v74
    %v88 = vunpack.c.l.b16 %v75
    %v89 = vunpack.c.l.b16 %v76
    %v90 = vpack.c.b16 %v87, %v86
    %v91 = vpack.c.b16 %v89, %v88
    %vm94 = vcmask 261120
    %v96 = vsel %vm94, %v81, 0
    %98 = vmatprep.subr.bf16.mxu0 0
    %99 = vmatpush1.bf16.msra.mxu0 %v90
    %100 = vmatprep.subr.bf16.mxu0 0
    %101 = vmatpush1.bf16.msra.mxu0 %v91
    %102 = vmatprep.subr.bf16.mxu0 0
    %103 = vmatpush1.bf16.msra.mxu0 0
    %104 = vmatprep.subr.bf16.mxu0 0
    %105 = vmatpush1.bf16.msra.mxu0 0
    %106 = vmatprep.subr.bf16.mxu0 0
    %107 = vmatpush1.bf16.msra.mxu0 0
    %108 = vmatprep.subr.bf16.mxu0 0
    %109 = vmatpush1.bf16.msra.mxu0 0
    %110 = vmatprep.subr.bf16.mxu0 0
    %111 = vmatpush1.bf16.msra.mxu0 0
    %112 = vmatprep.subr.bf16.mxu0 0
    %113 = vmatpush1.bf16.msra.mxu0 0
    %114 = vmatprep.subr.bf16.mxu0 0
    %115 = vmatpush1.bf16.msra.mxu0 0
    %116 = vmatprep.subr.bf16.mxu0 0
    %117 = vmatpush1.bf16.msra.mxu0 0
    %118 = vmatprep.subr.bf16.mxu0 0
    %119 = vmatpush1.bf16.msra.mxu0 0
    %120 = vmatprep.subr.bf16.mxu0 0
    %121 = vmatpush1.bf16.msra.mxu0 0
    %122 = vmatprep.subr.bf16.mxu0 0
    %123 = vmatpush1.bf16.msra.mxu0 0
    %124 = vmatprep.subr.bf16.mxu0 0
    %125 = vmatpush1.bf16.msra.mxu0 0
    %126 = vmatprep.subr.bf16.mxu0 0
    %127 = vmatpush1.bf16.msra.mxu0 0
    %128 = vmatprep.subr.bf16.mxu0 0
    %129 = vmatpush1.bf16.msra.mxu0 0
    %130 = vmatprep.mubr.bf16.mxu0 0
    %131 = vmatmul.mubr.bf16.gmra.mrb[0].mxu0 %v96
    %v132 = vpop.f32.mrb[0].mxu0
    %v133 = vadd.f32 0.0, %v132
    %v134 = vpop.f32.mrb[0].mxu0
    %v135 = vpop.f32.mrb[0].mxu0
    %v136 = vadd.f32 0.0, %v135
    %v137 = vpop.f32.mrb[0].mxu0
    %138 = vdwg.mxu0
    %v139 = vld [vmem:[#allocation2] sm:$0xff]
    %v140 = vld [vmem:[#allocation2 + $0x8] sm:$0xff]
    %141 = vmax.xlane.f32.xlu0 %v133
    %v142 = vpop.xlane.xlu0 %141
    %143 = vmax.xlane.f32.xlu0 %v136
    %v144 = vpop.xlane.xlu0 %143
    %v145 = vmax.f32 %v139, %v142
    %v146 = vmax.f32 %v140, %v144
    %v147 = vld [vmem:[#allocation3] sm:$0xff]
    %v148 = vld [vmem:[#allocation3 + $0x8] sm:$0xff]
    %v149 = vsub.f32 %v139, %v145
    %v150 = vsub.f32 %v140, %v146
    %v151 = vmul.f32 %v149, 1.442695
    %v152 = vpow.pop %v151
    %v153 = vmul.f32 %v150, 1.442695
    %v154 = vpow.pop %v153
    %v155 = vmul.f32 %v147, %v152
    %v156 = vmul.f32 %v148, %v154
    %158 = vset.pattern.permute.xlu0 0
    %159 = vperm.xlu0 %158, %v145
    %v160 = vpop.permute.xlu0 %159
    %163 = vset.pattern.permute.xlu0 0
    %164 = vperm.xlu0 %163, %v146
    %v165 = vpop.permute.xlu0 %164
    %v167 = vsub.f32 %v133, %v160
    %v168 = vsub.f32 %v136, %v165
    %v169 = vmul.f32 %v167, 1.442695
    %v170 = vpow.pop %v169
    %v171 = vmul.f32 %v168, 1.442695
    %v172 = vpow.pop %v171
    %173 = vadd.xlane.f32.xlu0 %v170
    %v174 = vpop.xlane.xlu0 %173
    %175 = vadd.xlane.f32.xlu0 %v172
    %v176 = vpop.xlane.xlu0 %175
    %v177 = vadd.f32 %v155, %v174
    %v178 = vadd.f32 %v156, %v176
    %vm179 = vcmask 7168
    %180 = vst.msk [vmem:[#allocation3] sm:$0xff] %vm179, %v177
    %181 = vst.msk [vmem:[#allocation3 + $0x8] sm:$0xff] %vm179, %v178
    %182 = vst.msk [vmem:[#allocation2] sm:$0xff] %vm179, %v145
    %183 = vst.msk [vmem:[#allocation2 + $0x8] sm:$0xff] %vm179, %v146
    %v184 = vld [vmem:[#allocation4] sm:$0xff]
    %v185 = vld [vmem:[#allocation4 + $0x8] sm:$0xff]
    %v186 = vld [vmem:[#allocation10] sm:$0xf]
    %v187 = vld [vmem:[#allocation10 + $0x4] sm:$0xf]
    %v188 = vld [vmem:[#allocation10 + $0x8] sm:$0xf]
    %v189 = vld [vmem:[#allocation10 + $0xc] sm:$0xf]
    %v190 = vld [vmem:[#allocation10 + $0x10] sm:$0xf]
    %v191 = vld [vmem:[#allocation10 + $0x14] sm:$0xf]
    %v192 = vld [vmem:[#allocation10 + $0x18] sm:$0xf]
    %v193 = vld [vmem:[#allocation10 + $0x1c] sm:$0xf]
    %v194 = vld [vmem:[#allocation10 + $0x20] sm:$0xf]
    %v195 = vld [vmem:[#allocation10 + $0x24] sm:$0xf]
    %v196 = vld [vmem:[#allocation10 + $0x28] sm:$0xf]
    %v197 = vld [vmem:[#allocation10 + $0x2c] sm:$0xf]
    %v198 = vld [vmem:[#allocation10 + $0x30] sm:$0xf]
    %v199 = vld [vmem:[#allocation10 + $0x34] sm:$0xf]
    %v200 = vld [vmem:[#allocation10 + $0x38] sm:$0xf]
    %v201 = vld [vmem:[#allocation10 + $0x3c] sm:$0xf]
    %v202 = vunpack.c.l.bf16 %v186
    %v203 = vunpack.c.l.bf16 %v187
    %v204 = vunpack.c.l.bf16 %v188
    %v205 = vunpack.c.l.bf16 %v189
    %v206 = vunpack.c.l.bf16 %v190
    %v207 = vunpack.c.l.bf16 %v191
    %v208 = vunpack.c.l.bf16 %v192
    %v209 = vunpack.c.l.bf16 %v193
    %v210 = vunpack.c.l.bf16 %v194
    %v211 = vunpack.c.l.bf16 %v195
    %v212 = vunpack.c.l.bf16 %v196
    %v213 = vunpack.c.l.bf16 %v197
    %v214 = vunpack.c.l.bf16 %v198
    %v215 = vunpack.c.l.bf16 %v199
    %v216 = vunpack.c.l.bf16 %v200
    %v217 = vunpack.c.l.bf16 %v201
    %218 = vmatprep.subr.mxu0 0.0
    %219 = vmatpush1.msra.mxu0 %v202
    %220 = vmatprep.subr.mxu0 0.0
    %221 = vmatpush1.msra.mxu0 %v203
    %222 = vmatprep.subr.mxu0 0.0
    %223 = vmatpush1.msra.mxu0 %v204
    %224 = vmatprep.subr.mxu0 0.0
    %225 = vmatpush1.msra.mxu0 %v205
    %226 = vmatprep.subr.mxu0 0.0
    %227 = vmatpush1.msra.mxu0 %v206
    %228 = vmatprep.subr.mxu0 0.0
    %229 = vmatpush1.msra.mxu0 %v207
    %230 = vmatprep.subr.mxu0 0.0
    %231 = vmatpush1.msra.mxu0 %v208
    %232 = vmatprep.subr.mxu0 0.0
    %233 = vmatpush1.msra.mxu0 %v209
    %234 = vmatprep.subr.mxu0 0.0
    %235 = vmatpush1.msra.mxu0 %v210
    %236 = vmatprep.subr.mxu0 0.0
    %237 = vmatpush1.msra.mxu0 %v211
    %238 = vmatprep.subr.mxu0 0.0
    %239 = vmatpush1.msra.mxu0 %v212
    %240 = vmatprep.subr.mxu0 0.0
    %241 = vmatpush1.msra.mxu0 %v213
    %242 = vmatprep.subr.mxu0 0.0
    %243 = vmatpush1.msra.mxu0 %v214
    %244 = vmatprep.subr.mxu0 0.0
    %245 = vmatpush1.msra.mxu0 %v215
    %246 = vmatprep.subr.mxu0 0.0
    %247 = vmatpush1.msra.mxu0 %v216
    %248 = vmatprep.subr.mxu0 0.0
    %249 = vmatpush1.msra.mxu0 %v217
    %250 = vmatprep.subr.mxu0 0.0
    %251 = vmatpush1.msra.mxu0 0.0
    %252 = vmatprep.subr.mxu0 0.0
    %253 = vmatpush1.msra.mxu0 0.0
    %254 = vmatprep.subr.mxu0 0.0
    %255 = vmatpush1.msra.mxu0 0.0
    %256 = vmatprep.subr.mxu0 0.0
    %257 = vmatpush1.msra.mxu0 0.0
    %258 = vmatprep.subr.mxu0 0.0
    %259 = vmatpush1.msra.mxu0 0.0
    %260 = vmatprep.subr.mxu0 0.0
    %261 = vmatpush1.msra.mxu0 0.0
    %262 = vmatprep.subr.mxu0 0.0
    %263 = vmatpush1.msra.mxu0 0.0
    %264 = vmatprep.subr.mxu0 0.0
    %265 = vmatpush1.msra.mxu0 0.0
    %266 = vmatprep.subr.mxu0 0.0
    %267 = vmatpush1.msra.mxu0 0.0
    %268 = vmatprep.subr.mxu0 0.0
    %269 = vmatpush1.msra.mxu0 0.0
    %270 = vmatprep.subr.mxu0 0.0
    %271 = vmatpush1.msra.mxu0 0.0
    %272 = vmatprep.subr.mxu0 0.0
    %273 = vmatpush1.msra.mxu0 0.0
    %274 = vmatprep.subr.mxu0 0.0
    %275 = vmatpush1.msra.mxu0 0.0
    %276 = vmatprep.subr.mxu0 0.0
    %277 = vmatpush1.msra.mxu0 0.0
    %278 = vmatprep.subr.mxu0 0.0
    %279 = vmatpush1.msra.mxu0 0.0
    %280 = vmatprep.subr.mxu0 0.0
    %281 = vmatpush1.msra.mxu0 0.0
    %282 = vmatprep.mubr.f32.mxu0 0.0
    %v283 = vand.u32 %v133, 4294901760
    %v284 = vsub.f32 %v133, %v283
    %v285 = vand.u32 %v284, 4294901760
    %v286 = vsub.f32 %v284, %v285
    %v287 = vand.u32 %v286, 4294901760
    %288 = vmatmul.mubr.f32.gmra.mrb[0].mxu0 %v287
    %v289 = vpop.f32.mrb[0].mxu0
    %v290 = vadd.f32 0.0, %v289
    %v291 = vpop.f32.mrb[0].mxu0
    %292 = vmatprep.mubr.f32.mxu0 0.0
    %v293 = vand.u32 %v136, 4294901760
    %v294 = vsub.f32 %v136, %v293
    %v295 = vand.u32 %v294, 4294901760
    %v296 = vsub.f32 %v294, %v295
    %v297 = vand.u32 %v296, 4294901760
    %298 = vmatmul.mubr.f32.gmra.mrb[0].mxu0 %v297
    %v299 = vpop.f32.mrb[0].mxu0
    %v300 = vadd.f32 0.0, %v299
    %v301 = vpop.f32.mrb[0].mxu0
    %302 = vdwg.mxu0
    %303 = vmatprep.subr.mxu0 0.0
    %v304 = vsub.f32 %v202, %v202
    %v305 = vand.u32 %v304, 4294901760
    %v306 = vsub.f32 %v304, %v305
    %v307 = vand.u32 %v306, 4294901760
    %308 = vmatpush1.msra.mxu0 %v307
    %309 = vmatprep.subr.mxu0 0.0
    %v310 = vsub.f32 %v203, %v203
    %v311 = vand.u32 %v310, 4294901760
    %v312 = vsub.f32 %v310, %v311
    %v313 = vand.u32 %v312, 4294901760
    %314 = vmatpush1.msra.mxu0 %v313
    %315 = vmatprep.subr.mxu0 0.0
    %v316 = vsub.f32 %v204, %v204
    %v317 = vand.u32 %v316, 4294901760
    %v318 = vsub.f32 %v316, %v317
    %v319 = vand.u32 %v318, 4294901760
    %320 = vmatpush1.msra.mxu0 %v319
    %321 = vmatprep.subr.mxu0 0.0
    %v322 = vsub.f32 %v205, %v205
    %v323 = vand.u32 %v322, 4294901760
    %v324 = vsub.f32 %v322, %v323
    %v325 = vand.u32 %v324, 4294901760
    %326 = vmatpush1.msra.mxu0 %v325
    %327 = vmatprep.subr.mxu0 0.0
    %v328 = vsub.f32 %v206, %v206
    %v329 = vand.u32 %v328, 4294901760
    %v330 = vsub.f32 %v328, %v329
    %v331 = vand.u32 %v330, 4294901760
    %332 = vmatpush1.msra.mxu0 %v331
    %333 = vmatprep.subr.mxu0 0.0
    %v334 = vsub.f32 %v207, %v207
    %v335 = vand.u32 %v334, 4294901760
    %v336 = vsub.f32 %v334, %v335
    %v337 = vand.u32 %v336, 4294901760
    %338 = vmatpush1.msra.mxu0 %v337
    %339 = vmatprep.subr.mxu0 0.0
    %v340 = vsub.f32 %v208, %v208
    %v341 = vand.u32 %v340, 4294901760
    %v342 = vsub.f32 %v340, %v341
    %v343 = vand.u32 %v342, 4294901760
    %344 = vmatpush1.msra.mxu0 %v343
    %345 = vmatprep.subr.mxu0 0.0
    %v346 = vsub.f32 %v209, %v209
    %v347 = vand.u32 %v346, 4294901760
    %v348 = vsub.f32 %v346, %v347
    %v349 = vand.u32 %v348, 4294901760
    %350 = vmatpush1.msra.mxu0 %v349
    %351 = vmatprep.subr.mxu0 0.0
    %v352 = vsub.f32 %v210, %v210
    %v353 = vand.u32 %v352, 4294901760
    %v354 = vsub.f32 %v352, %v353
    %v355 = vand.u32 %v354, 4294901760
    %356 = vmatpush1.msra.mxu0 %v355
    %357 = vmatprep.subr.mxu0 0.0
    %v358 = vsub.f32 %v211, %v211
    %v359 = vand.u32 %v358, 4294901760
    %v360 = vsub.f32 %v358, %v359
    %v361 = vand.u32 %v360, 4294901760
    %362 = vmatpush1.msra.mxu0 %v361
    %363 = vmatprep.subr.mxu0 0.0
    %v364 = vsub.f32 %v212, %v212
    %v365 = vand.u32 %v364, 4294901760
    %v366 = vsub.f32 %v364, %v365
    %v367 = vand.u32 %v366, 4294901760
    %368 = vmatpush1.msra.mxu0 %v367
    %369 = vmatprep.subr.mxu0 0.0
    %v370 = vsub.f32 %v213, %v213
    %v371 = vand.u32 %v370, 4294901760
    %v372 = vsub.f32 %v370, %v371
    %v373 = vand.u32 %v372, 4294901760
    %374 = vmatpush1.msra.mxu0 %v373
    %375 = vmatprep.subr.mxu0 0.0
    %v376 = vsub.f32 %v214, %v214
    %v377 = vand.u32 %v376, 4294901760
    %v378 = vsub.f32 %v376, %v377
    %v379 = vand.u32 %v378, 4294901760
    %380 = vmatpush1.msra.mxu0 %v379
    %381 = vmatprep.subr.mxu0 0.0
    %v382 = vsub.f32 %v215, %v215
    %v383 = vand.u32 %v382, 4294901760
    %v384 = vsub.f32 %v382, %v383
    %v385 = vand.u32 %v384, 4294901760
    %386 = vmatpush1.msra.mxu0 %v385
    %387 = vmatprep.subr.mxu0 0.0
    %v388 = vsub.f32 %v216, %v216
    %v389 = vand.u32 %v388, 4294901760
    %v390 = vsub.f32 %v388, %v389
    %v391 = vand.u32 %v390, 4294901760
    %392 = vmatpush1.msra.mxu0 %v391
    %393 = vmatprep.subr.mxu0 0.0
    %v394 = vsub.f32 %v217, %v217
    %v395 = vand.u32 %v394, 4294901760
    %v396 = vsub.f32 %v394, %v395
    %v397 = vand.u32 %v396, 4294901760
    %398 = vmatpush1.msra.mxu0 %v397
    %399 = vmatprep.subr.mxu0 0.0
    %400 = vmatpush1.msra.mxu0 0.0
    %401 = vmatprep.subr.mxu0 0.0
    %402 = vmatpush1.msra.mxu0 0.0
    %403 = vmatprep.subr.mxu0 0.0
    %404 = vmatpush1.msra.mxu0 0.0
    %405 = vmatprep.subr.mxu0 0.0
    %406 = vmatpush1.msra.mxu0 0.0
    %407 = vmatprep.subr.mxu0 0.0
    %408 = vmatpush1.msra.mxu0 0.0
    %409 = vmatprep.subr.mxu0 0.0
    %410 = vmatpush1.msra.mxu0 0.0
    %411 = vmatprep.subr.mxu0 0.0
    %412 = vmatpush1.msra.mxu0 0.0
    %413 = vmatprep.subr.mxu0 0.0
    %414 = vmatpush1.msra.mxu0 0.0
    %415 = vmatprep.subr.mxu0 0.0
    %416 = vmatpush1.msra.mxu0 0.0
    %417 = vmatprep.subr.mxu0 0.0
    %418 = vmatpush1.msra.mxu0 0.0
    %419 = vmatprep.subr.mxu0 0.0
    %420 = vmatpush1.msra.mxu0 0.0
    %421 = vmatprep.subr.mxu0 0.0
    %422 = vmatpush1.msra.mxu0 0.0
    %423 = vmatprep.subr.mxu0 0.0
    %424 = vmatpush1.msra.mxu0 0.0
    %425 = vmatprep.subr.mxu0 0.0
    %426 = vmatpush1.msra.mxu0 0.0
    %427 = vmatprep.subr.mxu0 0.0
    %428 = vmatpush1.msra.mxu0 0.0
    %429 = vmatprep.subr.mxu0 0.0
    %430 = vmatpush1.msra.mxu0 0.0
    %431 = vmatprep.mubr.f32.mxu0 0.0
    %v432 = vand.u32 %v133, 4294901760
    %433 = vmatmul.mubr.f32.gmra.mrb[0].mxu0 %v432
    %v434 = vpop.f32.mrb[0].mxu0
    %v435 = vadd.f32 %v290, %v434
    %v436 = vpop.f32.mrb[0].mxu0
    %437 = vmatprep.mubr.f32.mxu0 0.0
    %v438 = vand.u32 %v136, 4294901760
    %439 = vmatmul.mubr.f32.gmra.mrb[0].mxu0 %v438
    %v440 = vpop.f32.mrb[0].mxu0
    %v441 = vadd.f32 %v300, %v440
    %v442 = vpop.f32.mrb[0].mxu0
    %443 = vdwg.mxu0
    %444 = vmatprep.subr.mxu0 0.0
    %v445 = vsub.f32 %v202, %v202
    %446 = vmatpush1.msra.mxu0 %v445
    %447 = vmatprep.subr.mxu0 0.0
    %v448 = vsub.f32 %v203, %v203
    %449 = vmatpush1.msra.mxu0 %v448
    %450 = vmatprep.subr.mxu0 0.0
    %v451 = vsub.f32 %v204, %v204
    %452 = vmatpush1.msra.mxu0 %v451
    %453 = vmatprep.subr.mxu0 0.0
    %v454 = vsub.f32 %v205, %v205
    %455 = vmatpush1.msra.mxu0 %v454
    %456 = vmatprep.subr.mxu0 0.0
    %v457 = vsub.f32 %v206, %v206
    %458 = vmatpush1.msra.mxu0 %v457
    %459 = vmatprep.subr.mxu0 0.0
    %v460 = vsub.f32 %v207, %v207
    %461 = vmatpush1.msra.mxu0 %v460
    %462 = vmatprep.subr.mxu0 0.0
    %v463 = vsub.f32 %v208, %v208
    %464 = vmatpush1.msra.mxu0 %v463
    %465 = vmatprep.subr.mxu0 0.0
    %v466 = vsub.f32 %v209, %v209
    %467 = vmatpush1.msra.mxu0 %v466
    %468 = vmatprep.subr.mxu0 0.0
    %v469 = vsub.f32 %v210, %v210
    %470 = vmatpush1.msra.mxu0 %v469
    %471 = vmatprep.subr.mxu0 0.0
    %v472 = vsub.f32 %v211, %v211
    %473 = vmatpush1.msra.mxu0 %v472
    %474 = vmatprep.subr.mxu0 0.0
    %v475 = vsub.f32 %v212, %v212
    %476 = vmatpush1.msra.mxu0 %v475
    %477 = vmatprep.subr.mxu0 0.0
    %v478 = vsub.f32 %v213, %v213
    %479 = vmatpush1.msra.mxu0 %v478
    %480 = vmatprep.subr.mxu0 0.0
    %v481 = vsub.f32 %v214, %v214
    %482 = vmatpush1.msra.mxu0 %v481
    %483 = vmatprep.subr.mxu0 0.0
    %v484 = vsub.f32 %v215, %v215
    %485 = vmatpush1.msra.mxu0 %v484
    %486 = vmatprep.subr.mxu0 0.0
    %v487 = vsub.f32 %v216, %v216
    %488 = vmatpush1.msra.mxu0 %v487
    %489 = vmatprep.subr.mxu0 0.0
    %v490 = vsub.f32 %v217, %v217
    %491 = vmatpush1.msra.mxu0 %v490
    %492 = vmatprep.subr.mxu0 0.0
    %493 = vmatpush1.msra.mxu0 0.0
    %494 = vmatprep.subr.mxu0 0.0
    %495 = vmatpush1.msra.mxu0 0.0
    %496 = vmatprep.subr.mxu0 0.0
    %497 = vmatpush1.msra.mxu0 0.0
    %498 = vmatprep.subr.mxu0 0.0
    %499 = vmatpush1.msra.mxu0 0.0
    %500 = vmatprep.subr.mxu0 0.0
    %501 = vmatpush1.msra.mxu0 0.0
    %502 = vmatprep.subr.mxu0 0.0
    %503 = vmatpush1.msra.mxu0 0.0
    %504 = vmatprep.subr.mxu0 0.0
    %505 = vmatpush1.msra.mxu0 0.0
    %506 = vmatprep.subr.mxu0 0.0
    %507 = vmatpush1.msra.mxu0 0.0
    %508 = vmatprep.subr.mxu0 0.0
    %509 = vmatpush1.msra.mxu0 0.0
    %510 = vmatprep.subr.mxu0 0.0
    %511 = vmatpush1.msra.mxu0 0.0
    %512 = vmatprep.subr.mxu0 0.0
    %513 = vmatpush1.msra.mxu0 0.0
    %514 = vmatprep.subr.mxu0 0.0
    %515 = vmatpush1.msra.mxu0 0.0
    %516 = vmatprep.subr.mxu0 0.0
    %517 = vmatpush1.msra.mxu0 0.0
    %518 = vmatprep.subr.mxu0 0.0
    %519 = vmatpush1.msra.mxu0 0.0
    %520 = vmatprep.subr.mxu0 0.0
    %521 = vmatpush1.msra.mxu0 0.0
    %522 = vmatprep.subr.mxu0 0.0
    %523 = vmatpush1.msra.mxu0 0.0
    %524 = vmatprep.mubr.f32.mxu0 0.0
    %v525 = vand.u32 %v133, 4294901760
    %v526 = vsub.f32 %v133, %v525
    %527 = vmatmul.mubr.f32.gmra.mrb[0].mxu0 %v526
    %v528 = vpop.f32.mrb[0].mxu0
    %v529 = vadd.f32 %v435, %v528
    %v530 = vpop.f32.mrb[0].mxu0
    %531 = vmatprep.mubr.f32.mxu0 0.0
    %v532 = vand.u32 %v136, 4294901760
    %v533 = vsub.f32 %v136, %v532
    %534 = vmatmul.mubr.f32.gmra.mrb[0].mxu0 %v533
    %v535 = vpop.f32.mrb[0].mxu0
    %v536 = vadd.f32 %v441, %v535
    %v537 = vpop.f32.mrb[0].mxu0
    %538 = vdwg.mxu0
    %539 = vmatprep.subr.mxu0 0.0
    %540 = vmatpush1.msra.mxu0 %v202
    %541 = vmatprep.subr.mxu0 0.0
    %542 = vmatpush1.msra.mxu0 %v203
    %543 = vmatprep.subr.mxu0 0.0
    %544 = vmatpush1.msra.mxu0 %v204
    %545 = vmatprep.subr.mxu0 0.0
    %546 = vmatpush1.msra.mxu0 %v205
    %547 = vmatprep.subr.mxu0 0.0
    %548 = vmatpush1.msra.mxu0 %v206
    %549 = vmatprep.subr.mxu0 0.0
    %550 = vmatpush1.msra.mxu0 %v207
    %551 = vmatprep.subr.mxu0 0.0
    %552 = vmatpush1.msra.mxu0 %v208
    %553 = vmatprep.subr.mxu0 0.0
    %554 = vmatpush1.msra.mxu0 %v209
    %555 = vmatprep.subr.mxu0 0.0
    %556 = vmatpush1.msra.mxu0 %v210
    %557 = vmatprep.subr.mxu0 0.0
    %558 = vmatpush1.msra.mxu0 %v211
    %559 = vmatprep.subr.mxu0 0.0
    %560 = vmatpush1.msra.mxu0 %v212
    %561 = vmatprep.subr.mxu0 0.0
    %562 = vmatpush1.msra.mxu0 %v213
    %563 = vmatprep.subr.mxu0 0.0
    %564 = vmatpush1.msra.mxu0 %v214
    %565 = vmatprep.subr.mxu0 0.0
    %566 = vmatpush1.msra.mxu0 %v215
    %567 = vmatprep.subr.mxu0 0.0
    %568 = vmatpush1.msra.mxu0 %v216
    %569 = vmatprep.subr.mxu0 0.0
    %570 = vmatpush1.msra.mxu0 %v217
    %571 = vmatprep.subr.mxu0 0.0
    %572 = vmatpush1.msra.mxu0 0.0
    %573 = vmatprep.subr.mxu0 0.0
    %574 = vmatpush1.msra.mxu0 0.0
    %575 = vmatprep.subr.mxu0 0.0
    %576 = vmatpush1.msra.mxu0 0.0
    %577 = vmatprep.subr.mxu0 0.0
    %578 = vmatpush1.msra.mxu0 0.0
    %579 = vmatprep.subr.mxu0 0.0
    %580 = vmatpush1.msra.mxu0 0.0
    %581 = vmatprep.subr.mxu0 0.0
    %582 = vmatpush1.msra.mxu0 0.0
    %583 = vmatprep.subr.mxu0 0.0
    %584 = vmatpush1.msra.mxu0 0.0
    %585 = vmatprep.subr.mxu0 0.0
    %586 = vmatpush1.msra.mxu0 0.0
    %587 = vmatprep.subr.mxu0 0.0
    %588 = vmatpush1.msra.mxu0 0.0
    %589 = vmatprep.subr.mxu0 0.0
    %590 = vmatpush1.msra.mxu0 0.0
    %591 = vmatprep.subr.mxu0 0.0
    %592 = vmatpush1.msra.mxu0 0.0
    %593 = vmatprep.subr.mxu0 0.0
    %594 = vmatpush1.msra.mxu0 0.0
    %595 = vmatprep.subr.mxu0 0.0
    %596 = vmatpush1.msra.mxu0 0.0
    %597 = vmatprep.subr.mxu0 0.0
    %598 = vmatpush1.msra.mxu0 0.0
    %599 = vmatprep.subr.mxu0 0.0
    %600 = vmatpush1.msra.mxu0 0.0
    %601 = vmatprep.subr.mxu0 0.0
    %602 = vmatpush1.msra.mxu0 0.0
    %603 = vmatprep.mubr.f32.mxu0 0.0
    %v604 = vand.u32 %v133, 4294901760
    %v605 = vsub.f32 %v133, %v604
    %v606 = vand.u32 %v605, 4294901760
    %607 = vmatmul.mubr.f32.gmra.mrb[0].mxu0 %v606
    %v608 = vpop.f32.mrb[0].mxu0
    %v609 = vadd.f32 %v529, %v608
    %v610 = vpop.f32.mrb[0].mxu0
    %611 = vmatprep.mubr.f32.mxu0 0.0
    %v612 = vand.u32 %v136, 4294901760
    %v613 = vsub.f32 %v136, %v612
    %v614 = vand.u32 %v613, 4294901760
    %615 = vmatmul.mubr.f32.gmra.mrb[0].mxu0 %v614
    %v616 = vpop.f32.mrb[0].mxu0
    %v617 = vadd.f32 %v536, %v616
    %v618 = vpop.f32.mrb[0].mxu0
    %619 = vdwg.mxu0
    %620 = vmatprep.subr.mxu0 0.0
    %v621 = vsub.f32 %v202, %v202
    %v622 = vand.u32 %v621, 4294901760
    %623 = vmatpush1.msra.mxu0 %v622
    %624 = vmatprep.subr.mxu0 0.0
    %v625 = vsub.f32 %v203, %v203
    %v626 = vand.u32 %v625, 4294901760
    %627 = vmatpush1.msra.mxu0 %v626
    %628 = vmatprep.subr.mxu0 0.0
    %v629 = vsub.f32 %v204, %v204
    %v630 = vand.u32 %v629, 4294901760
    %631 = vmatpush1.msra.mxu0 %v630
    %632 = vmatprep.subr.mxu0 0.0
    %v633 = vsub.f32 %v205, %v205
    %v634 = vand.u32 %v633, 4294901760
    %635 = vmatpush1.msra.mxu0 %v634
    %636 = vmatprep.subr.mxu0 0.0
    %v637 = vsub.f32 %v206, %v206
    %v638 = vand.u32 %v637, 4294901760
    %639 = vmatpush1.msra.mxu0 %v638
    %640 = vmatprep.subr.mxu0 0.0
    %v641 = vsub.f32 %v207, %v207
    %v642 = vand.u32 %v641, 4294901760
    %643 = vmatpush1.msra.mxu0 %v642
    %644 = vmatprep.subr.mxu0 0.0
    %v645 = vsub.f32 %v208, %v208
    %v646 = vand.u32 %v645, 4294901760
    %647 = vmatpush1.msra.mxu0 %v646
    %648 = vmatprep.subr.mxu0 0.0
    %v649 = vsub.f32 %v209, %v209
    %v650 = vand.u32 %v649, 4294901760
    %651 = vmatpush1.msra.mxu0 %v650
    %652 = vmatprep.subr.mxu0 0.0
    %v653 = vsub.f32 %v210, %v210
    %v654 = vand.u32 %v653, 4294901760
    %655 = vmatpush1.msra.mxu0 %v654
    %656 = vmatprep.subr.mxu0 0.0
    %v657 = vsub.f32 %v211, %v211
    %v658 = vand.u32 %v657, 4294901760
    %659 = vmatpush1.msra.mxu0 %v658
    %660 = vmatprep.subr.mxu0 0.0
    %v661 = vsub.f32 %v212, %v212
    %v662 = vand.u32 %v661, 4294901760
    %663 = vmatpush1.msra.mxu0 %v662
    %664 = vmatprep.subr.mxu0 0.0
    %v665 = vsub.f32 %v213, %v213
    %v666 = vand.u32 %v665, 4294901760
    %667 = vmatpush1.msra.mxu0 %v666
    %668 = vmatprep.subr.mxu0 0.0
    %v669 = vsub.f32 %v214, %v214
    %v670 = vand.u32 %v669, 4294901760
    %671 = vmatpush1.msra.mxu0 %v670
    %672 = vmatprep.subr.mxu0 0.0
    %v673 = vsub.f32 %v215, %v215
    %v674 = vand.u32 %v673, 4294901760
    %675 = vmatpush1.msra.mxu0 %v674
    %676 = vmatprep.subr.mxu0 0.0
    %v677 = vsub.f32 %v216, %v216
    %v678 = vand.u32 %v677, 4294901760
    %679 = vmatpush1.msra.mxu0 %v678
    %680 = vmatprep.subr.mxu0 0.0
    %v681 = vsub.f32 %v217, %v217
    %v682 = vand.u32 %v681, 4294901760
    %683 = vmatpush1.msra.mxu0 %v682
    %684 = vmatprep.subr.mxu0 0.0
    %685 = vmatpush1.msra.mxu0 0.0
    %686 = vmatprep.subr.mxu0 0.0
    %687 = vmatpush1.msra.mxu0 0.0
    %688 = vmatprep.subr.mxu0 0.0
    %689 = vmatpush1.msra.mxu0 0.0
    %690 = vmatprep.subr.mxu0 0.0
    %691 = vmatpush1.msra.mxu0 0.0
    %692 = vmatprep.subr.mxu0 0.0
    %693 = vmatpush1.msra.mxu0 0.0
    %694 = vmatprep.subr.mxu0 0.0
    %695 = vmatpush1.msra.mxu0 0.0
    %696 = vmatprep.subr.mxu0 0.0
    %697 = vmatpush1.msra.mxu0 0.0
    %698 = vmatprep.subr.mxu0 0.0
    %699 = vmatpush1.msra.mxu0 0.0
    %700 = vmatprep.subr.mxu0 0.0
    %701 = vmatpush1.msra.mxu0 0.0
    %702 = vmatprep.subr.mxu0 0.0
    %703 = vmatpush1.msra.mxu0 0.0
    %704 = vmatprep.subr.mxu0 0.0
    %705 = vmatpush1.msra.mxu0 0.0
    %706 = vmatprep.subr.mxu0 0.0
    %707 = vmatpush1.msra.mxu0 0.0
    %708 = vmatprep.subr.mxu0 0.0
    %709 = vmatpush1.msra.mxu0 0.0
    %710 = vmatprep.subr.mxu0 0.0
    %711 = vmatpush1.msra.mxu0 0.0
    %712 = vmatprep.subr.mxu0 0.0
    %713 = vmatpush1.msra.mxu0 0.0
    %714 = vmatprep.subr.mxu0 0.0
    %715 = vmatpush1.msra.mxu0 0.0
    %716 = vmatprep.mubr.f32.mxu0 0.0
    %v717 = vand.u32 %v133, 4294901760
    %718 = vmatmul.mubr.f32.gmra.mrb[0].mxu0 %v717
    %v719 = vpop.f32.mrb[0].mxu0
    %v720 = vadd.f32 %v609, %v719
    %v721 = vpop.f32.mrb[0].mxu0
    %722 = vmatprep.mubr.f32.mxu0 0.0
    %v723 = vand.u32 %v136, 4294901760
    %724 = vmatmul.mubr.f32.gmra.mrb[0].mxu0 %v723
    %v725 = vpop.f32.mrb[0].mxu0
    %v726 = vadd.f32 %v617, %v725
    %v727 = vpop.f32.mrb[0].mxu0
    %728 = vdwg.mxu0
    %729 = vmatprep.subr.mxu0 0.0
    %730 = vmatpush1.msra.mxu0 %v202
    %731 = vmatprep.subr.mxu0 0.0
    %732 = vmatpush1.msra.mxu0 %v203
    %733 = vmatprep.subr.mxu0 0.0
    %734 = vmatpush1.msra.mxu0 %v204
    %735 = vmatprep.subr.mxu0 0.0
    %736 = vmatpush1.msra.mxu0 %v205
    %737 = vmatprep.subr.mxu0 0.0
    %738 = vmatpush1.msra.mxu0 %v206
    %739 = vmatprep.subr.mxu0 0.0
    %740 = vmatpush1.msra.mxu0 %v207
    %741 = vmatprep.subr.mxu0 0.0
    %742 = vmatpush1.msra.mxu0 %v208
    %743 = vmatprep.subr.mxu0 0.0
    %744 = vmatpush1.msra.mxu0 %v209
    %745 = vmatprep.subr.mxu0 0.0
    %746 = vmatpush1.msra.mxu0 %v210
    %747 = vmatprep.subr.mxu0 0.0
    %748 = vmatpush1.msra.mxu0 %v211
    %749 = vmatprep.subr.mxu0 0.0
    %750 = vmatpush1.msra.mxu0 %v212
    %751 = vmatprep.subr.mxu0 0.0
    %752 = vmatpush1.msra.mxu0 %v213
    %753 = vmatprep.subr.mxu0 0.0
    %754 = vmatpush1.msra.mxu0 %v214
    %755 = vmatprep.subr.mxu0 0.0
    %756 = vmatpush1.msra.mxu0 %v215
    %757 = vmatprep.subr.mxu0 0.0
    %758 = vmatpush1.msra.mxu0 %v216
    %759 = vmatprep.subr.mxu0 0.0
    %760 = vmatpush1.msra.mxu0 %v217
    %761 = vmatprep.subr.mxu0 0.0
    %762 = vmatpush1.msra.mxu0 0.0
    %763 = vmatprep.subr.mxu0 0.0
    %764 = vmatpush1.msra.mxu0 0.0
    %765 = vmatprep.subr.mxu0 0.0
    %766 = vmatpush1.msra.mxu0 0.0
    %767 = vmatprep.subr.mxu0 0.0
    %768 = vmatpush1.msra.mxu0 0.0
    %769 = vmatprep.subr.mxu0 0.0
    %770 = vmatpush1.msra.mxu0 0.0
    %771 = vmatprep.subr.mxu0 0.0
    %772 = vmatpush1.msra.mxu0 0.0
    %773 = vmatprep.subr.mxu0 0.0
    %774 = vmatpush1.msra.mxu0 0.0
    %775 = vmatprep.subr.mxu0 0.0
    %776 = vmatpush1.msra.mxu0 0.0
    %777 = vmatprep.subr.mxu0 0.0
    %778 = vmatpush1.msra.mxu0 0.0
    %779 = vmatprep.subr.mxu0 0.0
    %780 = vmatpush1.msra.mxu0 0.0
    %781 = vmatprep.subr.mxu0 0.0
    %782 = vmatpush1.msra.mxu0 0.0
    %783 = vmatprep.subr.mxu0 0.0
    %784 = vmatpush1.msra.mxu0 0.0
    %785 = vmatprep.subr.mxu0 0.0
    %786 = vmatpush1.msra.mxu0 0.0
    %787 = vmatprep.subr.mxu0 0.0
    %788 = vmatpush1.msra.mxu0 0.0
    %789 = vmatprep.subr.mxu0 0.0
    %790 = vmatpush1.msra.mxu0 0.0
    %791 = vmatprep.subr.mxu0 0.0
    %792 = vmatpush1.msra.mxu0 0.0
    %793 = vmatprep.mubr.f32.mxu0 0.0
    %v794 = vand.u32 %v133, 4294901760
    %795 = vmatmul.mubr.f32.gmra.mrb[0].mxu0 %v794
    %v796 = vpop.f32.mrb[0].mxu0
    %v797 = vadd.f32 %v720, %v796
    %v798 = vpop.f32.mrb[0].mxu0
    %799 = vmatprep.mubr.f32.mxu0 0.0
    %v800 = vand.u32 %v136, 4294901760
    %801 = vmatmul.mubr.f32.gmra.mrb[0].mxu0 %v800
    %v802 = vpop.f32.mrb[0].mxu0
    %v803 = vadd.f32 %v726, %v802
    %v804 = vpop.f32.mrb[0].mxu0
    %805 = vdwg.mxu0
    %v806 = vadd.f32 %v184, %v797
    %v807 = vadd.f32 %v185, %v803
    %808 = vst [vmem:[#allocation4] sm:$0xff] %v806
    %809 = vst [vmem:[#allocation4 + $0x8] sm:$0xff] %v807
    // Predicated region
    $region34: #{tpu_custom_call.1} parent=1 // pred_check
      %p810 = pneg %p60
    $region35: #{tpu_custom_call.1} parent=1 // pred_check_branch
      %812 = sbr.rel (%p810) target = $region37
    $region36: #{tpu_custom_call.1} parent=1 // pred_region
      %v813 = vld [vmem:[#allocation2] sm:$0xff]
      %v814 = vld [vmem:[#allocation2 + $0x8] sm:$0xff]
      %v815 = vld [vmem:[#allocation3] sm:$0xff]
      %v816 = vld [vmem:[#allocation3 + $0x8] sm:$0xff]
      %v817 = vlog2.pop %v815
      %v818 = vmul.f32 %v817, 0.6931472
      %v819 = vlog2.pop %v816
      %v820 = vmul.f32 %v819, 0.6931472
      %v821 = vadd.f32 %v813, %v818
      %v822 = vadd.f32 %v814, %v820
      %v823 = vld [vmem:[#allocation4] sm:$0xff]
      %v824 = vld [vmem:[#allocation4 + $0x8] sm:$0xff]
      %v825 = vld [vmem:[%s3] sm:$0x1]
      %827 = vset.pattern.permute.xlu0 0
      %828 = vperm.xlu0 %827, %v821
      %v829 = vpop.permute.xlu0 %828
      %832 = vset.pattern.permute.xlu0 0
      %833 = vperm.xlu0 %832, %v822
      %v834 = vpop.permute.xlu0 %833
      %v837 = vlaneseq
      %v838 = vshrl.u32 %v837, 7
      %v839 = vsub.s32 0, %v838
      %v840 = vrot.slane %v825, %v839
      %v842 = vmul.f32 %v829, %v840
      %v843 = vmul.f32 %v834, %v840
      %v844 = vsub.f32 %v823, %v842
      %v845 = vsub.f32 %v824, %v843
      %846 = vst [vmem:[#allocation11] sm:$0xff] %v844
      %847 = vst [vmem:[#allocation11 + $0x8] sm:$0xff] %v845
    $region37: #{tpu_custom_call.1} parent=1 // pred_fallthru
      _
    // Predicated region
    $region38: #{tpu_custom_call.1} parent=1 // pred_check
      _
    $region39: #{tpu_custom_call.1} parent=1 // pred_check_branch
      %849 = sbr.rel (0) target = $region41
    $region40: #{tpu_custom_call.1} parent=1 // pred_region
      %s851 = ssub.s32 256, 256
      %852 = vsyncadd [#allocation7], %s851
      %s853 = sshll.u32 [#allocation11], 4
      %s854 = int_to_ptr.vmem [resolvable:$true] %s853
      %859 = dma.vmem_to_hbm [thread:$0]  %s854, 256, %s4, [#allocation7], 128, 128, 8
    $region41: #{tpu_custom_call.1} parent=1 // pred_fallthru
      _
    // Predicated region
    $region42: #{tpu_custom_call.1} parent=1 // pred_check
      _
    $region43: #{tpu_custom_call.1} parent=1 // pred_check_branch
      %861 = sbr.rel (0) target = $region45
    $region44: #{tpu_custom_call.1} parent=1 // pred_region
      %862 = dma.done [#allocation7], 256
    $region45: #{tpu_custom_call.1} parent=1 // pred_fallthru
      _
    %863 = vsyncpa [#allocation6], 1
    %864 = vsyncpa [#allocation9], 1
    %865 = vsyncpa [#allocation7], 1

</llo_original>
